<compile_context>
chip_gen: v5e
topology: v5e:2x2
jax: 0.10.0
libtpu: 0.0.40
codegen_flags: <defaults>
</compile_context>

<pallas_src>
import functools

import numpy as np
import jax
import jax.numpy as jnp
from jax import lax
from jax.experimental import pallas as pl
from jax.experimental.pallas import tpu as pltpu


def _round_up(x, m):
    return ((x + m - 1) // m) * m


def _uniform_scalar(x):
    """Python float if `x` is a concrete scalar/array whose elements are all
    equal, else None (tracers / genuinely non-constant labels)."""
    if isinstance(x, (bool, int, float)):
        return float(x)
    try:
        arr = np.asarray(x)          # raises for tracers -> fall back
    except Exception:
        return None
    if arr.size == 0:
        return None
    v = arr.reshape(-1)[0]
    if np.all(arr == v):
        return float(v)
    return None


def _adv_loss_kernel(*refs, n_pairs, const_labels, rl_val, fl_val,
                     tm, grp, r_rows, mask_last, last_rows):
    """One (tm,128) tile of every score (and optionally label) tensor ->
    one lane-dense (r_rows,128) partial sum of squared errors."""
    score_refs = refs[:2 * n_pairs]
    if const_labels:
        out_ref = refs[2 * n_pairs]
        rl_ref = fl_ref = None
    else:
        rl_ref = refs[2 * n_pairs]
        fl_ref = refs[2 * n_pairs + 1]
        out_ref = refs[2 * n_pairs + 2]

    def labels_at(row, rows):
        if const_labels:
            return rl_val, fl_val            # compile-time constants (no HBM stream)
        rl = rl_ref[pl.ds(row, rows), :].astype(jnp.float32)
        fl = fl_ref[pl.ds(row, rows), :].astype(jnp.float32)
        return rl, fl

    def sq_err(row, rows):
        """(rows,128) sum over all real/fake pairs of squared errors."""
        rl, fl = labels_at(row, rows)
        a = jnp.zeros((rows, 128), jnp.float32)
        for p in range(n_pairs):             # n_pairs is tiny; unrolled at trace time
            r = score_refs[2 * p][pl.ds(row, rows), :].astype(jnp.float32)
            f = score_refs[2 * p + 1][pl.ds(row, rows), :].astype(jnp.float32)
            dr = r - rl
            df = f - fl
            a = a + (dr * dr + df * df)
        return a

    if r_rows == 1:
        # Tiny single tile (tm == full M, not a multiple of 8): full-tile compute.
        out_ref[...] = jnp.sum(sq_err(0, tm), axis=0, keepdims=True)
        return

    def fast_tile():
        # Unmasked tile: accumulate per (grp,128) chunk so live values stay in
        # a handful of vregs instead of (tm,128) f32 VMEM temporaries.
        n_groups = tm // grp

        def group(g, acc):
            if isinstance(g, int):
                row = g * grp
            else:
                row = pl.multiple_of(g * grp, grp)
            part = sq_err(row, grp)                               # (grp, 128)
            return acc + jnp.sum(part.reshape(grp // 8, 8, 128), axis=0)

        acc = jnp.zeros((8, 128), jnp.float32)
        if n_groups <= 8:
            for g in range(n_groups):
                acc = group(g, acc)
        else:
            acc = lax.fori_loop(0, n_groups, group, acc)
        out_ref[...] = acc

    if not mask_last:
        fast_tile()
        return

    is_last = pl.program_id(0) == pl.num_programs(0) - 1

    @pl.when(jnp.logical_not(is_last))
    def _():
        fast_tile()

    @pl.when(is_last)
    def _():
        # Only the single partial last tile pays for the row mask.  Rows past
        # `last_rows` hold undefined block padding; select (not multiply) so
        # even NaN garbage is harmless.
        rows = lax.broadcasted_iota(jnp.int32, (tm, 128), 0)
        part = jnp.where(rows < last_rows, sq_err(0, tm), 0.0)
        out_ref[...] = jnp.sum(part.reshape(tm // 8, 8, 128), axis=0)


def adversarial_loss(real_scores, fake_scores, real_labels, fake_labels,
                     *, tile_rows=1024):
    """Pallas implementation of AdversarialLoss.forward.  Returns scalar f32."""
    assert len(real_scores) == len(fake_scores)
    n_pairs = len(real_scores)
    assert n_pairs > 0
    shape = real_scores[0].shape
    for r, f in zip(real_scores, fake_scores):
        assert r.shape == shape and f.shape == shape
    # TODO(synk): multi-scale discriminators with per-scale score shapes would need
    # per-pair element counts / separate calls; this assumes the single shared shape
    # implied by the module's one labels tensor per side.

    rl_const = _uniform_scalar(real_labels)
    fl_const = _uniform_scalar(fake_labels)
    const_labels = (rl_const is not None) and (fl_const is not None)
    if not const_labels:
        assert real_labels.shape == shape and fake_labels.shape == shape

    n_elem = 1
    for d in shape:
        n_elem *= int(d)
    rem = n_elem % 128
    n_main = n_elem - rem
    M = n_main // 128

    def flat(x):
        return x.reshape(-1)

    def main_rows(x):
        v = flat(x)
        if rem:
            v = v[:n_main]            # aligned prefix (only in the rare ragged case)
        return v.reshape(M, 128)

    # <128-element lane tail per tensor: plain jnp, fuses into the final sum.
    tail_sum = jnp.float32(0.0)
    if rem:
        if const_labels:
            rl_t, fl_t = rl_const, fl_const
        else:
            rl_t = flat(real_labels)[n_main:].astype(jnp.float32)
            fl_t = flat(fake_labels)[n_main:].astype(jnp.float32)
        for r, f in zip(real_scores, fake_scores):
            dr = flat(r)[n_main:].astype(jnp.float32) - rl_t
            df = flat(f)[n_main:].astype(jnp.float32) - fl_t
            tail_sum = tail_sum + jnp.sum(dr * dr) + jnp.sum(df * df)

    if M == 0:
        # TODO(synk): fewer than 128 elements total -- nothing for a TPU kernel to do.
        return tail_sum / n_elem

    # ---- tiling / VMEM budget ------------------------------------------------
    stream_dtypes = [r.dtype for r in real_scores] + [f.dtype for f in fake_scores]
    if not const_labels:
        stream_dtypes += [real_labels.dtype, fake_labels.dtype]
    itemsize = max(jnp.dtype(d).itemsize for d in stream_dtypes)
    n_streams = len(stream_dtypes)

    # Keep double-buffered input blocks under ~12 MiB (fits v5e's 16 MiB scoped
    # default and leaves headroom on v7x's 64 MiB physical VMEM).
    vmem_block_budget = 12 * 1024 * 1024
    bytes_per_row = n_streams * 2 * 128 * itemsize
    tm_cap = max(8, min(int(tile_rows), vmem_block_budget // bytes_per_row, 2048))
    tm_cap -= tm_cap % 8
    tm_cap = max(tm_cap, 8)

    if M <= 16:
        tm = M                                  # single tile; full-dim block is legal
    else:
        # Guarantee >=2 grid tiles so the "parallel" axis can use both v7x TCs.
        tm = min(tm_cap, _round_up((M + 1) // 2, 8))
    n_tiles = (M + tm - 1) // tm
    r_rows = 8 if tm % 8 == 0 else 1
    mask_last = (M % tm) != 0
    last_rows = M - (n_tiles - 1) * tm
    grp = 32 if tm % 32 == 0 else (16 if tm % 16 == 0 else 8)

    inputs = []
    for r, f in zip(real_scores, fake_scores):
        inputs.append(main_rows(r))
        inputs.append(main_rows(f))
    tile_spec = pl.BlockSpec((tm, 128), lambda i: (i, 0))
    in_specs = [tile_spec] * (2 * n_pairs)
    if not const_labels:
        inputs.append(main_rows(real_labels))
        inputs.append(main_rows(fake_labels))
        in_specs += [tile_spec, tile_spec]

    kernel = functools.partial(
        _adv_loss_kernel, n_pairs=n_pairs, const_labels=const_labels,
        rl_val=(rl_const if const_labels else 0.0),
        fl_val=(fl_const if const_labels else 0.0),
        tm=tm, grp=grp, r_rows=r_rows, mask_last=mask_last, last_rows=last_rows)

    in_bytes = sum(n_main * jnp.dtype(d).itemsize for d in stream_dtypes)
    out_bytes = n_tiles * r_rows * 128 * 4
    cost = pl.CostEstimate(flops=6 * n_pairs * n_main, transcendentals=0,
                           bytes_accessed=in_bytes + out_bytes)

    partials = pl.pallas_call(
        kernel,
        out_shape=jax.ShapeDtypeStruct((n_tiles, r_rows, 128), jnp.float32),
        grid_spec=pltpu.PrefetchScalarGridSpec(
            num_scalar_prefetch=0,
            grid=(n_tiles,),
            in_specs=in_specs,
            out_specs=pl.BlockSpec((None, r_rows, 128), lambda i: (i, 0, 0)),
        ),
        compiler_params=pltpu.CompilerParams(
            dimension_semantics=("parallel",),
            vmem_limit_bytes=32 * 1024 * 1024),
        cost_estimate=cost,
    )(*inputs)

    total = jnp.sum(partials)
    if rem:
        total = total + tail_sum
    return total / n_elem


def _reference_loss(real_scores, fake_scores, real_labels, fake_labels):
    loss = jnp.float32(0.0)
    rl = jnp.asarray(real_labels).astype(jnp.float32)
    fl = jnp.asarray(fake_labels).astype(jnp.float32)
    for r, f in zip(real_scores, fake_scores):
        loss = loss + jnp.mean((r.astype(jnp.float32) - rl) ** 2)
        loss = loss + jnp.mean((f.astype(jnp.float32) - fl) ** 2)
    return loss


def _check(name, real_scores, fake_scores, real_labels, fake_labels, tol=1e-5):
    loss = adversarial_loss(real_scores, fake_scores, real_labels, fake_labels)
    loss = jax.block_until_ready(loss)
    ref = _reference_loss(real_scores, fake_scores, real_labels, fake_labels)
    assert jnp.allclose(loss, ref, rtol=tol, atol=tol), (name, float(loss), float(ref))


if __name__ == "__main__":
    key = jax.random.PRNGKey(0)

    def make_scores(k, shape, n, dtype=jnp.float32):
        ks = jax.random.split(k, 2 * n)
        rs = [jax.random.normal(ks[i], shape, jnp.float32).astype(dtype) for i in range(n)]
        fs = [jax.random.normal(ks[n + i], shape, jnp.float32).astype(dtype) for i in range(n)]
        return rs, fs

    k1, k2, k3, k4, k5 = jax.random.split(key, 5)

    # 1) Basic NCHW maps, constant labels -> const-label (no label streams), single tile.
    shape = (2, 4, 16, 16)
    rs, fs = make_scores(k1, shape, 3)
    _check("case1", rs, fs, jnp.ones(shape, jnp.float32), jnp.zeros(shape, jnp.float32))

    # 2) Multi-tile, 128-aligned, constant labels (unmasked fast path, grp chunks).
    shape = (2, 16, 32, 32)
    rs, fs = make_scores(k2, shape, 2)
    _check("case2", rs, fs, jnp.ones(shape, jnp.float32), jnp.zeros(shape, jnp.float32))

    # 3) Element count not a multiple of 128 -> kernel on aligned prefix + jnp tail.
    shape = (2, 1, 10, 10)
    rs, fs = make_scores(k3, shape, 2)
    _check("case3", rs, fs, jnp.ones(shape, jnp.float32), jnp.zeros(shape, jnp.float32))

    # 4) Non-constant labels (streamed-tensor fallback) + uneven last tile (row mask).
    shape = (3, 7, 32, 32)
    k4s, k4l = jax.random.split(k4)
    rs, fs = make_scores(k4s, shape, 3)
    kl1, kl2 = jax.random.split(k4l)
    rl = jax.random.normal(kl1, shape, jnp.float32)
    fl = jax.random.normal(kl2, shape, jnp.float32)
    _check("case4", rs, fs, rl, fl)

    # 5) bf16 scores, larger multi-tile (fori_loop chunked-accumulation path).
    shape = (8, 16, 32, 32)
    rs, fs = make_scores(k5, shape, 2, dtype=jnp.bfloat16)
    _check("case5", rs, fs, jnp.ones(shape, jnp.float32), jnp.zeros(shape, jnp.float32),
           tol=1e-4)

    print("KERNEL_OK")
</pallas_src>

<mosaic_0001>
module attributes {stable_mosaic.version = 11 : i64} {
  func.func @_adv_loss_kernel(%arg0: i32, %arg1: memref<16x128xf32, #tpu.memory_space<vmem>>, %arg2: memref<16x128xf32, #tpu.memory_space<vmem>>, %arg3: memref<16x128xf32, #tpu.memory_space<vmem>>, %arg4: memref<16x128xf32, #tpu.memory_space<vmem>>, %arg5: memref<16x128xf32, #tpu.memory_space<vmem>>, %arg6: memref<16x128xf32, #tpu.memory_space<vmem>>, %arg7: memref<1x8x128xf32, #tpu.memory_space<vmem>>) attributes {dimension_semantics = [#tpu.dimension_semantics<parallel>], iteration_bounds = array<i64: 1>, scalar_prefetch = 0 : i64, scratch_operands = 0 : i64, tpu.core_type = #tpu.core_type<tc>, window_params = [{transform_indices = @transform_0, window_bounds = array<i64: 16, 128>}, {transform_indices = @transform_1, window_bounds = array<i64: 16, 128>}, {transform_indices = @transform_2, window_bounds = array<i64: 16, 128>}, {transform_indices = @transform_3, window_bounds = array<i64: 16, 128>}, {transform_indices = @transform_4, window_bounds = array<i64: 16, 128>}, {transform_indices = @transform_5, window_bounds = array<i64: 16, 128>}, {transform_indices = @transform_6, window_bounds = array<i64: 1, 8, 128>}]} {
    %cst = arith.constant 0.000000e+00 : f32
    %0 = vector.broadcast %cst : f32 to vector<8x128xf32>
    %cst_0 = arith.constant 0.000000e+00 : f32
    %1 = vector.broadcast %cst_0 : f32 to vector<16x128xf32>
    %c0 = arith.constant 0 : index
    %c0_1 = arith.constant 0 : index
    %2 = vector.load %arg1[%c0, %c0_1] : memref<16x128xf32, #tpu.memory_space<vmem>>, vector<16x128xf32>
    %c0_2 = arith.constant 0 : index
    %c0_3 = arith.constant 0 : index
    %3 = vector.load %arg2[%c0_2, %c0_3] : memref<16x128xf32, #tpu.memory_space<vmem>>, vector<16x128xf32>
    %cst_4 = arith.constant 1.000000e+00 : f32
    %4 = vector.broadcast %cst_4 : f32 to vector<16x128xf32>
    %5 = arith.subf %2, %4 : vector<16x128xf32>
    %cst_5 = arith.constant 0.000000e+00 : f32
    %6 = vector.broadcast %cst_5 : f32 to vector<16x128xf32>
    %7 = arith.subf %3, %6 : vector<16x128xf32>
    %8 = arith.mulf %5, %5 : vector<16x128xf32>
    %9 = arith.mulf %7, %7 : vector<16x128xf32>
    %10 = arith.addf %8, %9 : vector<16x128xf32>
    %11 = arith.addf %1, %10 : vector<16x128xf32>
    %c0_6 = arith.constant 0 : index
    %c0_7 = arith.constant 0 : index
    %12 = vector.load %arg3[%c0_6, %c0_7] : memref<16x128xf32, #tpu.memory_space<vmem>>, vector<16x128xf32>
    %c0_8 = arith.constant 0 : index
    %c0_9 = arith.constant 0 : index
    %13 = vector.load %arg4[%c0_8, %c0_9] : memref<16x128xf32, #tpu.memory_space<vmem>>, vector<16x128xf32>
    %cst_10 = arith.constant 1.000000e+00 : f32
    %14 = vector.broadcast %cst_10 : f32 to vector<16x128xf32>
    %15 = arith.subf %12, %14 : vector<16x128xf32>
    %cst_11 = arith.constant 0.000000e+00 : f32
    %16 = vector.broadcast %cst_11 : f32 to vector<16x128xf32>
    %17 = arith.subf %13, %16 : vector<16x128xf32>
    %18 = arith.mulf %15, %15 : vector<16x128xf32>
    %19 = arith.mulf %17, %17 : vector<16x128xf32>
    %20 = arith.addf %18, %19 : vector<16x128xf32>
    %21 = arith.addf %11, %20 : vector<16x128xf32>
    %c0_12 = arith.constant 0 : index
    %c0_13 = arith.constant 0 : index
    %22 = vector.load %arg5[%c0_12, %c0_13] : memref<16x128xf32, #tpu.memory_space<vmem>>, vector<16x128xf32>
    %c0_14 = arith.constant 0 : index
    %c0_15 = arith.constant 0 : index
    %23 = vector.load %arg6[%c0_14, %c0_15] : memref<16x128xf32, #tpu.memory_space<vmem>>, vector<16x128xf32>
    %cst_16 = arith.constant 1.000000e+00 : f32
    %24 = vector.broadcast %cst_16 : f32 to vector<16x128xf32>
    %25 = arith.subf %22, %24 : vector<16x128xf32>
    %cst_17 = arith.constant 0.000000e+00 : f32
    %26 = vector.broadcast %cst_17 : f32 to vector<16x128xf32>
    %27 = arith.subf %23, %26 : vector<16x128xf32>
    %28 = arith.mulf %25, %25 : vector<16x128xf32>
    %29 = arith.mulf %27, %27 : vector<16x128xf32>
    %30 = arith.addf %28, %29 : vector<16x128xf32>
    %31 = arith.addf %21, %30 : vector<16x128xf32>
    %32 = vector.shape_cast %31 : vector<16x128xf32> to vector<2x8x128xf32>
    %cst_18 = arith.constant dense<0.000000e+00> : vector<8x128xf32>
    %33 = vector.multi_reduction <add>, %32, %cst_18 [0] : vector<2x8x128xf32> to vector<8x128xf32>
    %34 = arith.addf %0, %33 : vector<8x128xf32>
    %c0_19 = arith.constant 0 : index
    %c0_20 = arith.constant 0 : index
    %c0_21 = arith.constant 0 : index
    %35 = vector.load %arg7[%c0_19, %c0_20, %c0_21] : memref<1x8x128xf32, #tpu.memory_space<vmem>>, vector<1x8x128xf32>
    %36 = vector.shape_cast %35 : vector<1x8x128xf32> to vector<8x128xf32>
    %37 = vector.shape_cast %34 : vector<8x128xf32> to vector<1x8x128xf32>
    tpu.vector_store %arg7[%c0_19, %c0_20, %c0_21], %37 {strides = array<i32>} : memref<1x8x128xf32, #tpu.memory_space<vmem>>, vector<1x8x128xf32>,
    return
  }
  func.func @transform_0(%arg0: i32) -> (i32, i32) {
    %c0_i32 = arith.constant 0 : i32
    %c0_i32_0 = arith.constant 0 : i32
    return %arg0, %c0_i32 : i32, i32
  }
  func.func @transform_1(%arg0: i32) -> (i32, i32) {
    %c0_i32 = arith.constant 0 : i32
    %c0_i32_0 = arith.constant 0 : i32
    return %arg0, %c0_i32 : i32, i32
  }
  func.func @transform_2(%arg0: i32) -> (i32, i32) {
    %c0_i32 = arith.constant 0 : i32
    %c0_i32_0 = arith.constant 0 : i32
    return %arg0, %c0_i32 : i32, i32
  }
  func.func @transform_3(%arg0: i32) -> (i32, i32) {
    %c0_i32 = arith.constant 0 : i32
    %c0_i32_0 = arith.constant 0 : i32
    return %arg0, %c0_i32 : i32, i32
  }
  func.func @transform_4(%arg0: i32) -> (i32, i32) {
    %c0_i32 = arith.constant 0 : i32
    %c0_i32_0 = arith.constant 0 : i32
    return %arg0, %c0_i32 : i32, i32
  }
  func.func @transform_5(%arg0: i32) -> (i32, i32) {
    %c0_i32 = arith.constant 0 : i32
    %c0_i32_0 = arith.constant 0 : i32
    return %arg0, %c0_i32 : i32, i32
  }
  func.func @transform_6(%arg0: i32) -> (i32, i32, i32) {
    %c0_i32 = arith.constant 0 : i32
    %c0_i32_0 = arith.constant 0 : i32
    %c0_i32_1 = arith.constant 0 : i32
    return %arg0, %c0_i32, %c0_i32_0 : i32, i32, i32
  }
}

</mosaic_0001>

<llo_original>
// kernel: tpu_custom_call.1
$region0: #{tpu_custom_call.1}
  #allocation0 [shape = 'u32[]', space=smem, size = 0x4, offset = 0x4, fixed_abs, tag = 'smem constant byte address 0x4 - core index']
  #allocation1 [shape = 'u32[72,128]{1,0:T(1,128)}', space=vmem, size = 0x9000, scoped, tag = 'internal scratch']
  %s0 = inlined_call_operand.hbm [shape: f32[16,128], index: 0, kind: input, shape index: {}]
  %s1 = inlined_call_operand.hbm [shape: f32[16,128], index: 1, kind: input, shape index: {}]
  %s2 = inlined_call_operand.hbm [shape: f32[16,128], index: 2, kind: input, shape index: {}]
  %s3 = inlined_call_operand.hbm [shape: f32[16,128], index: 3, kind: input, shape index: {}]
  %s4 = inlined_call_operand.hbm [shape: f32[16,128], index: 4, kind: input, shape index: {}]
  %s5 = inlined_call_operand.hbm [shape: f32[16,128], index: 5, kind: input, shape index: {}]
  %s6 = inlined_call_operand.hbm [shape: f32[1,8,128], index: 6, kind: output, shape index: {}]
  %s7 = sld [smem:[#allocation0]]
  $region58: #{tpu_custom_call.1} parent=0
    _
  %s9 = ssub.s32 1, %s7
  %s10 = scalar_select 0, %s9, %s7
  $region1: #{tpu_custom_call.1} parent=0
    #allocation2 [shape = 'u8[8192]{0}', space=vmem, size = 0x2000, scoped, tag = 'input window, operand 0, single buffered']
    #allocation3 [shape = 's32[1]{0}', space=sflag, size = 0x4, scoped, tag = 'scoped memory for tpu_custom_call.1']
    #allocation4 [shape = 's32[1]{0}', space=sflag, size = 0x4, scoped, tag = 'scoped memory for tpu_custom_call.1']
    #allocation5 [shape = 'u8[8192]{0}', space=vmem, size = 0x2000, scoped, tag = 'input window, operand 1, single buffered']
    #allocation6 [shape = 's32[1]{0}', space=sflag, size = 0x4, scoped, tag = 'scoped memory for tpu_custom_call.1']
    #allocation7 [shape = 'u8[8192]{0}', space=vmem, size = 0x2000, scoped, tag = 'input window, operand 2, single buffered']
    #allocation8 [shape = 'u8[8192]{0}', space=vmem, size = 0x2000, scoped, tag = 'input window, operand 3, single buffered']
    #allocation9 [shape = 's32[1]{0}', space=sflag, size = 0x4, scoped, tag = 'scoped memory for tpu_custom_call.1']
    #allocation10 [shape = 'u8[8192]{0}', space=vmem, size = 0x2000, scoped, tag = 'input window, operand 4, single buffered']
    #allocation11 [shape = 'u8[8192]{0}', space=vmem, size = 0x2000, scoped, tag = 'input window, operand 5, single buffered']
    #allocation12 [shape = 's32[1]{0}', space=sflag, size = 0x4, scoped, tag = 'scoped memory for tpu_custom_call.1']
    #allocation13 [shape = 'u8[4096]{0}', space=vmem, size = 0x1000, scoped, tag = 'output window, operand 0, single buffered']
    %11 = vsyncpa [#allocation3], 0
    %12 = vsyncpa [#allocation6], 0
    %13 = vsyncpa [#allocation9], 0
    %14 = vsyncpa [#allocation12], 0
    %15 = vsyncpa [#allocation4], 0
    // Predicated region
    $region2: #{tpu_custom_call.1} parent=1 // pred_check
      _
    $region3: #{tpu_custom_call.1} parent=1 // pred_check_branch
      %17 = sbr.rel (0) target = $region5
    $region4: #{tpu_custom_call.1} parent=1 // pred_region
      %19 = vsyncadd [#allocation3], 0
      %s20 = sshll.u32 %s0, 4
      %s21 = int_to_ptr.hbm [resolvable:$true] %s20
      %s22 = sshll.u32 [#allocation2], 4
      %s23 = int_to_ptr.vmem [resolvable:$true] %s22
      %28 = dma.hbm_to_vmem [thread:$0]  %s21, 256, %s23, [#allocation3], 128, 128, 8
    $region5: #{tpu_custom_call.1} parent=1 // pred_fallthru
      _
    // Predicated region
    $region6: #{tpu_custom_call.1} parent=1 // pred_check
      _
    $region7: #{tpu_custom_call.1} parent=1 // pred_check_branch
      %30 = sbr.rel (0) target = $region9
    $region8: #{tpu_custom_call.1} parent=1 // pred_region
      %32 = vsyncadd [#allocation6], 0
      %s33 = sshll.u32 %s1, 4
      %s34 = int_to_ptr.hbm [resolvable:$true] %s33
      %s35 = sshll.u32 [#allocation5], 4
      %s36 = int_to_ptr.vmem [resolvable:$true] %s35
      %41 = dma.hbm_to_vmem [thread:$0]  %s34, 256, %s36, [#allocation6], 128, 128, 8
    $region9: #{tpu_custom_call.1} parent=1 // pred_fallthru
      _
    // Predicated region
    $region10: #{tpu_custom_call.1} parent=1 // pred_check
      _
    $region11: #{tpu_custom_call.1} parent=1 // pred_check_branch
      %43 = sbr.rel (0) target = $region13
    $region12: #{tpu_custom_call.1} parent=1 // pred_region
      %45 = vsyncadd [#allocation6], 0
      %s46 = sshll.u32 %s2, 4
      %s47 = int_to_ptr.hbm [resolvable:$true] %s46
      %s48 = sshll.u32 [#allocation7], 4
      %s49 = int_to_ptr.vmem [resolvable:$true] %s48
      %54 = dma.hbm_to_vmem [thread:$0]  %s47, 256, %s49, [#allocation6], 128, 128, 8
    $region13: #{tpu_custom_call.1} parent=1 // pred_fallthru
      _
    // Predicated region
    $region14: #{tpu_custom_call.1} parent=1 // pred_check
      _
    $region15: #{tpu_custom_call.1} parent=1 // pred_check_branch
      %56 = sbr.rel (0) target = $region17
    $region16: #{tpu_custom_call.1} parent=1 // pred_region
      %58 = vsyncadd [#allocation9], 0
      %s59 = sshll.u32 %s3, 4
      %s60 = int_to_ptr.hbm [resolvable:$true] %s59
      %s61 = sshll.u32 [#allocation8], 4
      %s62 = int_to_ptr.vmem [resolvable:$true] %s61
      %67 = dma.hbm_to_vmem [thread:$0]  %s60, 256, %s62, [#allocation9], 128, 128, 8
    $region17: #{tpu_custom_call.1} parent=1 // pred_fallthru
      _
    // Predicated region
    $region18: #{tpu_custom_call.1} parent=1 // pred_check
      _
    $region19: #{tpu_custom_call.1} parent=1 // pred_check_branch
      %69 = sbr.rel (0) target = $region21
    $region20: #{tpu_custom_call.1} parent=1 // pred_region
      %71 = vsyncadd [#allocation9], 0
      %s72 = sshll.u32 %s4, 4
      %s73 = int_to_ptr.hbm [resolvable:$true] %s72
      %s74 = sshll.u32 [#allocation10], 4
      %s75 = int_to_ptr.vmem [resolvable:$true] %s74
      %80 = dma.hbm_to_vmem [thread:$0]  %s73, 256, %s75, [#allocation9], 128, 128, 8
    $region21: #{tpu_custom_call.1} parent=1 // pred_fallthru
      _
    // Predicated region
    $region22: #{tpu_custom_call.1} parent=1 // pred_check
      _
    $region23: #{tpu_custom_call.1} parent=1 // pred_check_branch
      %82 = sbr.rel (0) target = $region25
    $region24: #{tpu_custom_call.1} parent=1 // pred_region
      %84 = vsyncadd [#allocation12], 0
      %s85 = sshll.u32 %s5, 4
      %s86 = int_to_ptr.hbm [resolvable:$true] %s85
      %s87 = sshll.u32 [#allocation11], 4
      %s88 = int_to_ptr.vmem [resolvable:$true] %s87
      %93 = dma.hbm_to_vmem [thread:$0]  %s86, 256, %s88, [#allocation12], 128, 128, 8
    $region25: #{tpu_custom_call.1} parent=1 // pred_fallthru
      _
    // Predicated region
    $region26: #{tpu_custom_call.1} parent=1 // pred_check
      _
    $region27: #{tpu_custom_call.1} parent=1 // pred_check_branch
      %95 = sbr.rel (0) target = $region29
    $region28: #{tpu_custom_call.1} parent=1 // pred_region
      %97 = dma.done [#allocation3], 256
    $region29: #{tpu_custom_call.1} parent=1 // pred_fallthru
      _
    // Predicated region
    $region30: #{tpu_custom_call.1} parent=1 // pred_check
      _
    $region31: #{tpu_custom_call.1} parent=1 // pred_check_branch
      %99 = sbr.rel (0) target = $region33
    $region32: #{tpu_custom_call.1} parent=1 // pred_region
      %101 = dma.done [#allocation6], 256
    $region33: #{tpu_custom_call.1} parent=1 // pred_fallthru
      _
    // Predicated region
    $region34: #{tpu_custom_call.1} parent=1 // pred_check
      _
    $region35: #{tpu_custom_call.1} parent=1 // pred_check_branch
      %103 = sbr.rel (0) target = $region37
    $region36: #{tpu_custom_call.1} parent=1 // pred_region
      %105 = dma.done [#allocation6], 256
    $region37: #{tpu_custom_call.1} parent=1 // pred_fallthru
      _
    // Predicated region
    $region38: #{tpu_custom_call.1} parent=1 // pred_check
      _
    $region39: #{tpu_custom_call.1} parent=1 // pred_check_branch
      %107 = sbr.rel (0) target = $region41
    $region40: #{tpu_custom_call.1} parent=1 // pred_region
      %109 = dma.done [#allocation9], 256
    $region41: #{tpu_custom_call.1} parent=1 // pred_fallthru
      _
    // Predicated region
    $region42: #{tpu_custom_call.1} parent=1 // pred_check
      _
    $region43: #{tpu_custom_call.1} parent=1 // pred_check_branch
      %111 = sbr.rel (0) target = $region45
    $region44: #{tpu_custom_call.1} parent=1 // pred_region
      %113 = dma.done [#allocation9], 256
    $region45: #{tpu_custom_call.1} parent=1 // pred_fallthru
      _
    // Predicated region
    $region46: #{tpu_custom_call.1} parent=1 // pred_check
      _
    $region47: #{tpu_custom_call.1} parent=1 // pred_check_branch
      %115 = sbr.rel (0) target = $region49
    $region48: #{tpu_custom_call.1} parent=1 // pred_region
      %117 = dma.done [#allocation12], 256
    $region49: #{tpu_custom_call.1} parent=1 // pred_fallthru
      _
    %v118 = vld [vmem:[#allocation2] sm:$0xff]
    %v119 = vld [vmem:[#allocation2 + $0x8] sm:$0xff]
    %v120 = vld [vmem:[#allocation5] sm:$0xff]
    %v121 = vld [vmem:[#allocation5 + $0x8] sm:$0xff]
    %v122 = vsub.f32 %v118, 1.0
    %v123 = vsub.f32 %v119, 1.0
    %v124 = vmul.f32 %v122, %v122
    %v125 = vmul.f32 %v123, %v123
    %v126 = vmul.f32 %v120, %v120
    %v127 = vmul.f32 %v121, %v121
    %v128 = vadd.f32 %v124, %v126
    %v129 = vadd.f32 %v125, %v127
    %v130 = vadd.f32 %v128, 0.0
    %v131 = vadd.f32 %v129, 0.0
    %v132 = vld [vmem:[#allocation7] sm:$0xff]
    %v133 = vld [vmem:[#allocation7 + $0x8] sm:$0xff]
    %v134 = vld [vmem:[#allocation8] sm:$0xff]
    %v135 = vld [vmem:[#allocation8 + $0x8] sm:$0xff]
    %v136 = vsub.f32 %v132, 1.0
    %v137 = vsub.f32 %v133, 1.0
    %v138 = vmul.f32 %v136, %v136
    %v139 = vmul.f32 %v137, %v137
    %v140 = vmul.f32 %v134, %v134
    %v141 = vmul.f32 %v135, %v135
    %v142 = vadd.f32 %v138, %v140
    %v143 = vadd.f32 %v139, %v141
    %v144 = vadd.f32 %v130, %v142
    %v145 = vadd.f32 %v131, %v143
    %v146 = vld [vmem:[#allocation10] sm:$0xff]
    %v147 = vld [vmem:[#allocation10 + $0x8] sm:$0xff]
    %v148 = vld [vmem:[#allocation11] sm:$0xff]
    %v149 = vld [vmem:[#allocation11 + $0x8] sm:$0xff]
    %v150 = vsub.f32 %v146, 1.0
    %v151 = vsub.f32 %v147, 1.0
    %v152 = vmul.f32 %v150, %v150
    %v153 = vmul.f32 %v151, %v151
    %v154 = vmul.f32 %v148, %v148
    %v155 = vmul.f32 %v149, %v149
    %v156 = vadd.f32 %v152, %v154
    %v157 = vadd.f32 %v153, %v155
    %v158 = vadd.f32 %v144, %v156
    %v159 = vadd.f32 %v145, %v157
    %v160 = vadd.f32 %v158, %v159
    %v161 = vadd.f32 %v160, 0.0
    %162 = vst [vmem:[#allocation13] sm:$0xff] %v161
    // Predicated region
    $region50: #{tpu_custom_call.1} parent=1 // pred_check
      _
    $region51: #{tpu_custom_call.1} parent=1 // pred_check_branch
      %164 = sbr.rel (0) target = $region53
    $region52: #{tpu_custom_call.1} parent=1 // pred_region
      %166 = vsyncadd [#allocation4], 0
      %s168 = sshll.u32 [#allocation13], 4
      %s169 = int_to_ptr.vmem [resolvable:$true] %s168
      %s170 = sshll.u32 %s6, 4
      %s171 = int_to_ptr.hbm [resolvable:$true] %s170
      %173 = dma.vmem_to_hbm [thread:$0]  %s169, 128, %s171, [#allocation4]
    $region53: #{tpu_custom_call.1} parent=1 // pred_fallthru
      _
    // Predicated region
    $region54: #{tpu_custom_call.1} parent=1 // pred_check
      _
    $region55: #{tpu_custom_call.1} parent=1 // pred_check_branch
      %175 = sbr.rel (0) target = $region57
    $region56: #{tpu_custom_call.1} parent=1 // pred_region
      %177 = dma.done [#allocation4], 128
    $region57: #{tpu_custom_call.1} parent=1 // pred_fallthru
      _
    %178 = vsyncpa [#allocation3], 1
    %179 = vsyncpa [#allocation6], 1
    %180 = vsyncpa [#allocation9], 1
    %181 = vsyncpa [#allocation12], 1
    %182 = vsyncpa [#allocation4], 1

</llo_original>
